<compile_context>
chip_gen: v7x
topology: tpu7x:2x2x1
jax: 0.10.0
libtpu: 0.0.40
codegen_flags: <defaults>
</compile_context>

<pallas_src>
import functools

import jax
import jax.numpy as jnp
from jax.experimental import pallas as pl
from jax.experimental.pallas import tpu as pltpu


def _round_up(x, m):
    return ((x + m - 1) // m) * m


def _ordinal_contrastive_kernel(a_ref, b_ref, ld_ref, loss_ref, *,
                                n_valid, block_rows, eps):
    a = a_ref[...].astype(jnp.float32)      # (T, D)
    b = b_ref[...].astype(jnp.float32)      # (T, D)
    ld = ld_ref[...].astype(jnp.float32)    # (T, 1)

    # Row-wise reductions along the lane axis (XLU slot, overlaps with VPU work).
    dot = jnp.sum(a * b, axis=-1, keepdims=True)    # (T, 1)
    na2 = jnp.sum(a * a, axis=-1, keepdims=True)    # (T, 1)
    nb2 = jnp.sum(b * b, axis=-1, keepdims=True)    # (T, 1)

    # torch.cosine_similarity: w12 / sqrt(clamp(w1*w2, eps^2))  -- one sqrt/row.
    denom = jnp.sqrt(jnp.maximum(na2 * nb2, eps * eps))
    cos = dot / denom
    dist = 1.0 - cos                                # (T, 1)

    is_pos = (ld == 0.0).astype(jnp.float32)
    neg = jnp.maximum(ld - dist, 0.0)               # relu(label_distance - d)

    # .pow(2) specialized to plain multiplies (VPU), no jnp.power.
    per_row = 0.5 * (is_pos * dist * dist + (1.0 - is_pos) * neg * neg)  # (T, 1)

    # Mask out padded rows so the wrapper can sum the whole output.
    row = (pl.program_id(0) * block_rows
           + jax.lax.broadcasted_iota(jnp.int32, per_row.shape, 0))
    loss_ref[...] = jnp.where(row < n_valid, per_row, 0.0)


def ordinal_contrastive_loss(rep_anchor, rep_other, label_distances, *,
                             size_average=True, block_rows=512, eps=1e-8):
    """rep_anchor/rep_other: (N, D) float; label_distances: (N,) -> scalar loss."""
    n, d = rep_anchor.shape
    assert rep_other.shape == (n, d)

    # Tile the batch dim: multiple of 8 sublanes, <= block_rows, <= padded N.
    t = min(block_rows, _round_up(n, 8))
    t = max(8, _round_up(t, 8))
    n_pad = _round_up(n, t)
    num_tiles = n_pad // t

    def pad_rows(x):
        extra = n_pad - x.shape[0]
        if extra:
            x = jnp.pad(x, ((0, extra),) + ((0, 0),) * (x.ndim - 1))
        return x

    a = pad_rows(rep_anchor)                                   # keep input dtype on DMA path
    b = pad_rows(rep_other)
    ld = pad_rows(label_distances.astype(jnp.float32).reshape(n, 1))

    itemsize = jnp.dtype(rep_anchor.dtype).itemsize
    cost = pl.CostEstimate(
        flops=8 * n * d,                                        # 3 fused mul+reduce passes + epilogue
        transcendentals=2 * n,                                  # sqrt + divide per row
        bytes_accessed=2 * n * d * itemsize + 2 * n * 4,
    )
    # Double-buffered inputs/outputs per tile + headroom; clamp to v7x-safe range.
    vmem_limit = int(min(max(4 * (2 * t * d * itemsize + 8 * t) + (2 << 20),
                             16 << 20),
                         64 << 20))

    per_row = pl.pallas_call(
        functools.partial(_ordinal_contrastive_kernel,
                          n_valid=n, block_rows=t, eps=float(eps)),
        out_shape=jax.ShapeDtypeStruct((n_pad, 1), jnp.float32),
        grid=(num_tiles,),
        in_specs=[
            pl.BlockSpec((t, d), lambda i: (i, 0)),
            pl.BlockSpec((t, d), lambda i: (i, 0)),
            pl.BlockSpec((t, 1), lambda i: (i, 0)),
        ],
        out_specs=pl.BlockSpec((t, 1), lambda i: (i, 0)),
        compiler_params=pltpu.CompilerParams(
            dimension_semantics=("parallel",),
            vmem_limit_bytes=vmem_limit,
        ),
        cost_estimate=cost,
    )(a, b, ld)

    total = jnp.sum(per_row)                                    # tiny host-side reduction
    return total / jnp.float32(n) if size_average else total


def ordinal_contrastive_loss_ref(rep_anchor, rep_other, label_distances,
                                 size_average=True, eps=1e-8):
    """Pure-JAX reference matching the torch module."""
    a = rep_anchor.astype(jnp.float32)
    b = rep_other.astype(jnp.float32)
    dot = jnp.sum(a * b, axis=-1)
    na2 = jnp.sum(a * a, axis=-1)
    nb2 = jnp.sum(b * b, axis=-1)
    cos = dot / jnp.sqrt(jnp.maximum(na2 * nb2, eps * eps))
    dist = 1.0 - cos
    ld = label_distances.astype(jnp.float32)
    is_pos = (ld == 0.0).astype(jnp.float32)
    losses = 0.5 * (is_pos * dist ** 2
                    + (1.0 - is_pos) * jnp.maximum(ld - dist, 0.0) ** 2)
    return jnp.mean(losses) if size_average else jnp.sum(losses)


if __name__ == "__main__":
    key = jax.random.PRNGKey(0)
    k_a, k_b, k_l = jax.random.split(key, 3)

    # Small shapes: 50 sentence pairs, hidden=32, num_classes=4 ordinal labels.
    # N=50 with block_rows=16 exercises the grid (4 tiles) and tail masking.
    N, D, NUM_CLASSES = 50, 32, 4
    rep_anchor = jax.random.normal(k_a, (N, D), dtype=jnp.float32)
    rep_other = jax.random.normal(k_b, (N, D), dtype=jnp.float32)
    label_distances = jax.random.randint(k_l, (N,), 0, NUM_CLASSES).astype(jnp.float32)

    loss = ordinal_contrastive_loss(rep_anchor, rep_other, label_distances,
                                    block_rows=16)
    jax.block_until_ready(loss)

    ref = ordinal_contrastive_loss_ref(rep_anchor, rep_other, label_distances)
    assert jnp.allclose(loss, ref, rtol=1e-5, atol=1e-6), (loss, ref)

    print("KERNEL_OK")
</pallas_src>

<mosaic_0001>
module attributes {stable_mosaic.version = 11 : i64} {
  func.func @_ordinal_contrastive_kernel(%arg0: i32, %arg1: memref<16x32xf32, #tpu.memory_space<vmem>>, %arg2: memref<16x32xf32, #tpu.memory_space<vmem>>, %arg3: memref<16x1xf32, #tpu.memory_space<vmem>>, %arg4: memref<16x1xf32, #tpu.memory_space<vmem>>) attributes {dimension_semantics = [#tpu.dimension_semantics<parallel>], iteration_bounds = array<i64: 4>, scalar_prefetch = 0 : i64, scratch_operands = 0 : i64, tpu.core_type = #tpu.core_type<tc>, window_params = [{transform_indices = @transform_0, window_bounds = array<i64: 16, 32>}, {transform_indices = @transform_1, window_bounds = array<i64: 16, 32>}, {transform_indices = @transform_2, window_bounds = array<i64: 16, 1>}, {transform_indices = @transform_3, window_bounds = array<i64: 16, 1>}]} {
    %c0 = arith.constant 0 : index
    %c0_0 = arith.constant 0 : index
    %0 = vector.load %arg1[%c0, %c0_0] : memref<16x32xf32, #tpu.memory_space<vmem>>, vector<16x32xf32>
    %c0_1 = arith.constant 0 : index
    %c0_2 = arith.constant 0 : index
    %1 = vector.load %arg2[%c0_1, %c0_2] : memref<16x32xf32, #tpu.memory_space<vmem>>, vector<16x32xf32>
    %c0_3 = arith.constant 0 : index
    %c0_4 = arith.constant 0 : index
    %2 = vector.load %arg3[%c0_3, %c0_4] : memref<16x1xf32, #tpu.memory_space<vmem>>, vector<16x1xf32>
    %3 = arith.mulf %0, %1 : vector<16x32xf32>
    %cst = arith.constant dense<0.000000e+00> : vector<16xf32>
    %4 = vector.multi_reduction <add>, %3, %cst [1] : vector<16x32xf32> to vector<16xf32>
    %5 = vector.shape_cast %4 : vector<16xf32> to vector<16x1xf32>
    %6 = arith.mulf %0, %0 : vector<16x32xf32>
    %cst_5 = arith.constant dense<0.000000e+00> : vector<16xf32>
    %7 = vector.multi_reduction <add>, %6, %cst_5 [1] : vector<16x32xf32> to vector<16xf32>
    %8 = vector.shape_cast %7 : vector<16xf32> to vector<16x1xf32>
    %9 = arith.mulf %1, %1 : vector<16x32xf32>
    %cst_6 = arith.constant dense<0.000000e+00> : vector<16xf32>
    %10 = vector.multi_reduction <add>, %9, %cst_6 [1] : vector<16x32xf32> to vector<16xf32>
    %11 = vector.shape_cast %10 : vector<16xf32> to vector<16x1xf32>
    %12 = arith.mulf %8, %11 : vector<16x1xf32>
    %cst_7 = arith.constant 1.000000e-16 : f32
    %13 = vector.broadcast %cst_7 : f32 to vector<16x1xf32>
    %14 = arith.maximumf %12, %13 : vector<16x1xf32>
    %15 = math.sqrt %14 : vector<16x1xf32>
    %16 = arith.divf %5, %15 : vector<16x1xf32>
    %cst_8 = arith.constant 1.000000e+00 : f32
    %17 = vector.broadcast %cst_8 : f32 to vector<16x1xf32>
    %18 = arith.subf %17, %16 : vector<16x1xf32>
    %cst_9 = arith.constant 0.000000e+00 : f32
    %19 = vector.broadcast %cst_9 : f32 to vector<16x1xf32>
    %20 = arith.cmpf oeq, %2, %19 : vector<16x1xf32>
    %21 = arith.extui %20 : vector<16x1xi1> to vector<16x1xi32>
    %22 = arith.sitofp %21 : vector<16x1xi32> to vector<16x1xf32>
    %23 = arith.subf %2, %18 : vector<16x1xf32>
    %cst_10 = arith.constant 0.000000e+00 : f32
    %24 = vector.broadcast %cst_10 : f32 to vector<16x1xf32>
    %25 = arith.maximumf %23, %24 : vector<16x1xf32>
    %26 = arith.mulf %22, %18 : vector<16x1xf32>
    %27 = arith.mulf %26, %18 : vector<16x1xf32>
    %cst_11 = arith.constant 1.000000e+00 : f32
    %28 = vector.broadcast %cst_11 : f32 to vector<16x1xf32>
    %29 = arith.subf %28, %22 : vector<16x1xf32>
    %30 = arith.mulf %29, %25 : vector<16x1xf32>
    %31 = arith.mulf %30, %25 : vector<16x1xf32>
    %32 = arith.addf %27, %31 : vector<16x1xf32>
    %cst_12 = arith.constant 5.000000e-01 : f32
    %33 = vector.broadcast %cst_12 : f32 to vector<16x1xf32>
    %34 = arith.mulf %33, %32 : vector<16x1xf32>
    %c16_i32 = arith.constant 16 : i32
    %35 = arith.muli %arg0, %c16_i32 : i32
    %36 = tpu.iota {dimensions = array<i32: 0>} : vector<16x1xi32>
    %37 = vector.broadcast %35 : i32 to vector<16x1xi32>
    %38 = arith.addi %37, %36 : vector<16x1xi32>
    %c50_i32 = arith.constant 50 : i32
    %39 = vector.broadcast %c50_i32 : i32 to vector<16x1xi32>
    %40 = arith.cmpi slt, %38, %39 : vector<16x1xi32>
    %cst_13 = arith.constant 0.000000e+00 : f32
    %41 = vector.broadcast %cst_13 : f32 to vector<16x1xf32>
    %42 = arith.select %40, %34, %41 : vector<16x1xi1>, vector<16x1xf32>
    %c0_14 = arith.constant 0 : index
    %c0_15 = arith.constant 0 : index
    %43 = vector.load %arg4[%c0_14, %c0_15] : memref<16x1xf32, #tpu.memory_space<vmem>>, vector<16x1xf32>
    tpu.vector_store %arg4[%c0_14, %c0_15], %42 {strides = array<i32>} : memref<16x1xf32, #tpu.memory_space<vmem>>, vector<16x1xf32>,
    return
  }
  func.func @transform_0(%arg0: i32) -> (i32, i32) {
    %c0_i32 = arith.constant 0 : i32
    %c0_i32_0 = arith.constant 0 : i32
    return %arg0, %c0_i32 : i32, i32
  }
  func.func @transform_1(%arg0: i32) -> (i32, i32) {
    %c0_i32 = arith.constant 0 : i32
    %c0_i32_0 = arith.constant 0 : i32
    return %arg0, %c0_i32 : i32, i32
  }
  func.func @transform_2(%arg0: i32) -> (i32, i32) {
    %c0_i32 = arith.constant 0 : i32
    %c0_i32_0 = arith.constant 0 : i32
    return %arg0, %c0_i32 : i32, i32
  }
  func.func @transform_3(%arg0: i32) -> (i32, i32) {
    %c0_i32 = arith.constant 0 : i32
    %c0_i32_0 = arith.constant 0 : i32
    return %arg0, %c0_i32 : i32, i32
  }
}

</mosaic_0001>

<llo_original>
// kernel: tpu_custom_call.1
$region0: #{tpu_custom_call.1}
  #allocation0 [shape = 'u32[]', space=smem, size = 0x4, offset = 0x4, fixed_abs, tag = 'smem constant byte address 0x4 - core index']
  #allocation1 [shape = 'u32[144,128]{1,0:T(1,128)}', space=vmem, size = 0x12000, scoped, tag = 'internal scratch']
  %s0 = inlined_call_operand.vmem [shape: f32[64,32], index: 0, kind: input, shape index: {}]
  %s1 = inlined_call_operand.vmem [shape: f32[64,32], index: 1, kind: input, shape index: {}]
  %s2 = inlined_call_operand.vmem [shape: f32[64,1], index: 2, kind: input, shape index: {}]
  %s3 = inlined_call_operand.vmem [shape: f32[64,1], index: 3, kind: output, shape index: {}]
  %s4 = sld [smem:[#allocation0]]
  $region45: #{tpu_custom_call.1} parent=0
    _
  %s6 = ssub.s32 1, %s4
  %s7 = scalar_select 0, %s6, %s4
  loop: start=0, step=1, limit=6
  $region2: #{tpu_custom_call.1} parent=0 // loop_pre_header
    _
  $region3: #{tpu_custom_call.1} parent=0 // loop_header
    %s9 = sphi 0, %s13
    %p10 = scmp.ge.s32.totalorder %s9, 6
    %s19 = sphi 0, %s21
    %s22 = sphi 0, %s19
    %s23 = sphi 0, %s22
    %s39 = sphi 0, %s23
    %s45 = sphi 0, %s47
    %s48 = sphi 0, %s45
    %s49 = sphi 0, %s48
    %s65 = sphi 0, %s49
    %s71 = sphi 0, %s73
    %s74 = sphi 0, %s71
    %s75 = sphi 0, %s74
    %s91 = sphi 0, %s75
    %s97 = sphi 0, %s99
    %s100 = sphi 0, %s97
    %s101 = sphi 0, %s100
    %s117 = sphi 0, %s101
  $region4: #{tpu_custom_call.1} parent=0 // loop_header_branch
    %12 = sbr.rel (%p10) target = $region8
  $region5: #{tpu_custom_call.1} parent=0 // loop_body
    %s14 = ssub.s32 %s9, 1
    %s15 = ssub.s32 %s9, 2
    %s16 = sadd.s32 %s9, 1
    %s17 = ssub.s32 %s9, %s16
    %p18 = scmp.eq.s32.totalorder %s17, 0
    %s20 = sadd.s32 %s19, 1
    %s21 = scalar_select %p18, %s19, %s20
    %p24 = pneg %p18
    %p25 = scmp.eq.s32.totalorder %s9, 3
    %p26 = por %p24, %p25
    %p27 = scmp.ne.s32.totalorder %s19, %s22
    %p28 = scmp.eq.s32.totalorder %s9, 0
    %p29 = por %p27, %p28
    %p30 = scmp.ne.s32.totalorder %s19, %s22
    %p31 = scmp.eq.s32.totalorder %s14, 3
    %p32 = por %p30, %p31
    %p33 = scmp.ne.s32.totalorder %s22, %s23
    %p34 = scmp.eq.s32.totalorder %s14, 0
    %p35 = por %p33, %p34
    %p36 = scmp.ne.s32.totalorder %s22, %s23
    %p37 = scmp.eq.s32.totalorder %s15, 3
    %p38 = por %p36, %p37
    %p40 = scmp.ne.s32.totalorder %s23, %s39
    %p41 = scmp.eq.s32.totalorder %s15, 0
    %p42 = por %p40, %p41
    %s43 = ssub.s32 %s9, %s16
    %p44 = scmp.eq.s32.totalorder %s43, 0
    %s46 = sadd.s32 %s45, 1
    %s47 = scalar_select %p44, %s45, %s46
    %p50 = pneg %p44
    %p51 = scmp.eq.s32.totalorder %s9, 3
    %p52 = por %p50, %p51
    %p53 = scmp.ne.s32.totalorder %s45, %s48
    %p54 = scmp.eq.s32.totalorder %s9, 0
    %p55 = por %p53, %p54
    %p56 = scmp.ne.s32.totalorder %s45, %s48
    %p57 = scmp.eq.s32.totalorder %s14, 3
    %p58 = por %p56, %p57
    %p59 = scmp.ne.s32.totalorder %s48, %s49
    %p60 = scmp.eq.s32.totalorder %s14, 0
    %p61 = por %p59, %p60
    %p62 = scmp.ne.s32.totalorder %s48, %s49
    %p63 = scmp.eq.s32.totalorder %s15, 3
    %p64 = por %p62, %p63
    %p66 = scmp.ne.s32.totalorder %s49, %s65
    %p67 = scmp.eq.s32.totalorder %s15, 0
    %p68 = por %p66, %p67
    %s69 = ssub.s32 %s9, %s16
    %p70 = scmp.eq.s32.totalorder %s69, 0
    %s72 = sadd.s32 %s71, 1
    %s73 = scalar_select %p70, %s71, %s72
    %p76 = pneg %p70
    %p77 = scmp.eq.s32.totalorder %s9, 3
    %p78 = por %p76, %p77
    %p79 = scmp.ne.s32.totalorder %s71, %s74
    %p80 = scmp.eq.s32.totalorder %s9, 0
    %p81 = por %p79, %p80
    %p82 = scmp.ne.s32.totalorder %s71, %s74
    %p83 = scmp.eq.s32.totalorder %s14, 3
    %p84 = por %p82, %p83
    %p85 = scmp.ne.s32.totalorder %s74, %s75
    %p86 = scmp.eq.s32.totalorder %s14, 0
    %p87 = por %p85, %p86
    %p88 = scmp.ne.s32.totalorder %s74, %s75
    %p89 = scmp.eq.s32.totalorder %s15, 3
    %p90 = por %p88, %p89
    %p92 = scmp.ne.s32.totalorder %s75, %s91
    %p93 = scmp.eq.s32.totalorder %s15, 0
    %p94 = por %p92, %p93
    %s95 = ssub.s32 %s9, %s16
    %p96 = scmp.eq.s32.totalorder %s95, 0
    %s98 = sadd.s32 %s97, 1
    %s99 = scalar_select %p96, %s97, %s98
    %p102 = pneg %p96
    %p103 = scmp.eq.s32.totalorder %s9, 3
    %p104 = por %p102, %p103
    %p105 = scmp.ne.s32.totalorder %s97, %s100
    %p106 = scmp.eq.s32.totalorder %s9, 0
    %p107 = por %p105, %p106
    %p108 = scmp.ne.s32.totalorder %s97, %s100
    %p109 = scmp.eq.s32.totalorder %s14, 3
    %p110 = por %p108, %p109
    %p111 = scmp.ne.s32.totalorder %s100, %s101
    %p112 = scmp.eq.s32.totalorder %s14, 0
    %p113 = por %p111, %p112
    %p114 = scmp.ne.s32.totalorder %s100, %s101
    %p115 = scmp.eq.s32.totalorder %s15, 3
    %p116 = por %p114, %p115
    %p118 = scmp.ne.s32.totalorder %s101, %s117
    %p119 = scmp.eq.s32.totalorder %s15, 0
    %p120 = por %p118, %p119
    %p121 = scmp.le.s32.totalorder 1, %s9
    %p122 = scmp.lt.s32.totalorder %s9, 5
    %p123 = pnand %p121, %p122
    %p124 = pneg %p123
    // Predicated region
    $region9: #{tpu_custom_call.1} parent=5 // pred_check
      _
    $region10: #{tpu_custom_call.1} parent=5 // pred_check_branch
      %126 = sbr.rel (%p123) target = $region12
    $region11: #{tpu_custom_call.1} parent=5 // pred_region
      %s127 = ssub.s32 %s9, 1
    $region12: #{tpu_custom_call.1} parent=5 // pred_fallthru
      _
    %p128 = scmp.lt.s32.totalorder %s9, 4
    // Predicated region
    $region13: #{tpu_custom_call.1} parent=5 // pred_check
      %p129 = pneg %p128
    $region14: #{tpu_custom_call.1} parent=5 // pred_check_branch
      %131 = sbr.rel (%p129) target = $region16
    $region15: #{tpu_custom_call.1} parent=5 // pred_region
      // Predicated region
      $region17: #{tpu_custom_call.1} parent=15 // pred_check
        %p132 = pneg %p29
      $region18: #{tpu_custom_call.1} parent=15 // pred_check_branch
        %134 = sbr.rel (%p132) target = $region20
      $region19: #{tpu_custom_call.1} parent=15 // pred_region
        %s135 = smul.u32 2, %s9
        %p136 = scmp.lt.s32.totalorder %s135, 7
        %s137 = scalar_select %p136, %s135, 7
        %s138 = smul.addr %s137, 8
        %s139 = scalar_lea.vmem %s0, %s138
        %s140 = smul.u32 2, %s9
      $region20: #{tpu_custom_call.1} parent=15 // pred_fallthru
        _
      // Predicated region
      $region21: #{tpu_custom_call.1} parent=15 // pred_check
        %p141 = pneg %p55
      $region22: #{tpu_custom_call.1} parent=15 // pred_check_branch
        %143 = sbr.rel (%p141) target = $region24
      $region23: #{tpu_custom_call.1} parent=15 // pred_region
        %s144 = smul.u32 2, %s9
        %p145 = scmp.lt.s32.totalorder %s144, 7
        %s146 = scalar_select %p145, %s144, 7
        %s147 = smul.addr %s146, 8
        %s148 = scalar_lea.vmem %s1, %s147
        %s149 = smul.u32 2, %s9
      $region24: #{tpu_custom_call.1} parent=15 // pred_fallthru
        _
      // Predicated region
      $region25: #{tpu_custom_call.1} parent=15 // pred_check
        %p150 = pneg %p81
      $region26: #{tpu_custom_call.1} parent=15 // pred_check_branch
        %152 = sbr.rel (%p150) target = $region28
      $region27: #{tpu_custom_call.1} parent=15 // pred_region
        %s153 = smul.u32 2, %s9
        %p154 = scmp.lt.s32.totalorder %s153, 7
        %s155 = scalar_select %p154, %s153, 7
        %s156 = smul.addr %s155, 8
        %s157 = scalar_lea.vmem %s2, %s156
        %s158 = smul.u32 2, %s9
      $region28: #{tpu_custom_call.1} parent=15 // pred_fallthru
        _
    $region16: #{tpu_custom_call.1} parent=5 // pred_fallthru
      _
    %p159 = scmp.le.s32.totalorder 1, %s9
    %p160 = scmp.lt.s32.totalorder %s9, 5
    %p161 = pnand %p159, %p160
    %p162 = pneg %p161
    // Predicated region
    $region29: #{tpu_custom_call.1} parent=5 // pred_check
      _
    $region30: #{tpu_custom_call.1} parent=5 // pred_check_branch
      %164 = sbr.rel (%p161) target = $region32
    $region31: #{tpu_custom_call.1} parent=5 // pred_region
      %s165 = ssub.s32 %s9, 1
      %s166 = smul.u32 2, %s14
      %p167 = scmp.lt.s32.totalorder %s166, 7
      %s168 = scalar_select %p167, %s166, 7
      %s169 = smul.addr %s168, 8
      %s170 = scalar_lea.vmem %s0, %s169
      %p171 = pneg %p35
      %p172 = pneg %p32
      %s173 = smul.u32 2, %s14
      %p174 = scmp.lt.s32.totalorder %s173, 7
      %s175 = scalar_select %p174, %s173, 7
      %s176 = smul.addr %s175, 8
      %s177 = scalar_lea.vmem %s1, %s176
      %p178 = pneg %p61
      %p179 = pneg %p58
      %s180 = smul.u32 2, %s14
      %p181 = scmp.lt.s32.totalorder %s180, 7
      %s182 = scalar_select %p181, %s180, 7
      %s183 = smul.addr %s182, 8
      %s184 = scalar_lea.vmem %s2, %s183
      %p185 = pneg %p87
      %p186 = pneg %p84
      %p187 = pneg %p113
      %p188 = pneg %p110
      %s189 = smul.u32 2, %s14
      %p190 = scmp.lt.s32.totalorder %s189, 7
      %s191 = scalar_select %p190, %s189, 7
      %s192 = smul.addr %s191, 8
      %s193 = scalar_lea.vmem %s3, %s192
      %s194 = smul.u32 2, %s14
      %p195 = scmp.lt.s32.totalorder %s194, 7
      %s196 = scalar_select %p195, %s194, 7
      %s197 = smul.addr %s196, 8
      %s198 = scalar_lea.vmem %s0, %s197
      %s199 = smul.u32 2, %s14
      %s200 = smul.u32 2, %s14
      %p201 = scmp.lt.s32.totalorder %s200, 7
      %s202 = scalar_select %p201, %s200, 7
      %s203 = smul.addr %s202, 8
      %s204 = scalar_lea.vmem %s1, %s203
      %s205 = smul.u32 2, %s14
      %s206 = smul.u32 2, %s14
      %p207 = scmp.lt.s32.totalorder %s206, 7
      %s208 = scalar_select %p207, %s206, 7
      %s209 = smul.addr %s208, 8
      %s210 = scalar_lea.vmem %s2, %s209
      %s211 = smul.u32 2, %s14
      %s212 = smul.u32 2, %s14
      %p213 = scmp.lt.s32.totalorder %s212, 7
      %s214 = scalar_select %p213, %s212, 7
      %s215 = smul.addr %s214, 8
      %s216 = scalar_lea.vmem %s3, %s215
      %s217 = smul.u32 2, %s14
      %v218 = vld [vmem:[%s198] sm:$0xff]
      %v219 = vld [vmem:[%s198 + $0x8] sm:$0xff]
      %v220 = vld [vmem:[%s204] sm:$0xff]
      %v221 = vld [vmem:[%s204 + $0x8] sm:$0xff]
      %v222 = vld [vmem:[%s210] sm:$0xff]
      %v223 = vld [vmem:[%s210 + $0x8] sm:$0xff]
      %v224 = vmul.f32 %v218, %v220
      %v225 = vmul.f32 %v219, %v221
      %vm226 = vcmask 261120
      %v227 = vsel %vm226, %v224, 0.0
      %228 = vadd.xlane.f32.xlu0 %v227
      %v229 = vpop.xlane.xlu0 %228
      %v230 = vsel %vm226, %v225, 0.0
      %231 = vadd.xlane.f32.xlu0 %v230
      %v232 = vpop.xlane.xlu0 %231
      %v233 = vmul.f32 %v218, %v218
      %v234 = vmul.f32 %v219, %v219
      %v235 = vsel %vm226, %v233, 0.0
      %236 = vadd.xlane.f32.xlu0 %v235
      %v237 = vpop.xlane.xlu0 %236
      %v238 = vsel %vm226, %v234, 0.0
      %239 = vadd.xlane.f32.xlu0 %v238
      %v240 = vpop.xlane.xlu0 %239
      %v241 = vmul.f32 %v220, %v220
      %v242 = vmul.f32 %v221, %v221
      %v243 = vsel %vm226, %v241, 0.0
      %244 = vadd.xlane.f32.xlu0 %v243
      %v245 = vpop.xlane.xlu0 %244
      %v246 = vsel %vm226, %v242, 0.0
      %247 = vadd.xlane.f32.xlu0 %v246
      %v248 = vpop.xlane.xlu0 %247
      %v249 = vmul.f32 %v237, %v245
      %v250 = vmul.f32 %v240, %v248
      %v251 = vmax.f32 %v249, 1e-16
      %v252 = vmax.f32 %v250, 1e-16
      %v253 = vrsqrt.pop %v251
      %v254 = vmul.f32 %v251, %v253
      %vm255 = vcmp.eq.f32.partialorder %v251, inf
      %v256 = vsel %vm255, %v251, %v254
      %vm257 = vcmp.eq.f32.partialorder %v251, 0.0
      %v258 = vand.u32 %v251, 2147483648
      %v259 = vsel %vm257, %v258, %v256
      %v260 = vrsqrt.pop %v252
      %v261 = vmul.f32 %v252, %v260
      %vm262 = vcmp.eq.f32.partialorder %v252, inf
      %v263 = vsel %vm262, %v252, %v261
      %vm264 = vcmp.eq.f32.partialorder %v252, 0.0
      %v265 = vand.u32 %v252, 2147483648
      %v266 = vsel %vm264, %v265, %v263
      %v267 = vrcp.pop %v259
      %v268 = vmul.f32 %v229, %v267
      %v269 = vrcp.pop %v266
      %v270 = vmul.f32 %v232, %v269
      %v271 = vsub.f32 1.0, %v268
      %v272 = vsub.f32 1.0, %v270
      %vm273 = vcmp.eq.f32.partialorder %v222, 0.0
      %vm274 = vcmp.eq.f32.partialorder %v223, 0.0
      %v275 = vsel %vm273, 1, 0
      %v276 = vsel %vm274, 1, 0
      %v277 = vcvt.s32.f32 %v275
      %v278 = vcvt.s32.f32 %v276
      %v279 = vsub.f32 %v222, %v271
      %v280 = vsub.f32 %v223, %v272
      %v281 = vmax.f32 %v279, 0.0
      %v282 = vmax.f32 %v280, 0.0
      %v283 = vmul.f32 %v277, %v271
      %v284 = vmul.f32 %v278, %v272
      %v285 = vmul.f32 %v283, %v271
      %v286 = vmul.f32 %v284, %v272
      %v287 = vsub.f32 1.0, %v277
      %v288 = vsub.f32 1.0, %v278
      %v289 = vmul.f32 %v287, %v281
      %v290 = vmul.f32 %v288, %v282
      %v291 = vmul.f32 %v289, %v281
      %v292 = vmul.f32 %v290, %v282
      %v293 = vadd.f32 %v285, %v291
      %v294 = vadd.f32 %v286, %v292
      %v295 = vmul.f32 %v293, 0.5
      %v296 = vmul.f32 %v294, 0.5
      %s297 = smul.u32 %s14, 16
      %v298 = vlaneseq
      %v299 = vshrl.u32 %v298, 7
      %v300 = vadd.s32 %v299, 8
      %v301 = vstv %s297
      %v302 = vadd.s32 %v301, %v299
      %v303 = vadd.s32 %v301, %v300
      %vm304 = vcmp.lt.s32.totalorder %v302, 50
      %vm305 = vcmp.lt.s32.totalorder %v303, 50
      %v306 = vsel %vm304, %v295, 0.0
      %v307 = vsel %vm305, %v296, 0.0
      %vm308 = vcmask 7168
      %309 = vst.msk [vmem:[%s216] sm:$0xff] %vm308, %v306
      %310 = vst.msk [vmem:[%s216 + $0x8] sm:$0xff] %vm308, %v307
      %s311 = smul.u32 2, %s14
      %p312 = scmp.lt.s32.totalorder %s311, 7
      %s313 = scalar_select %p312, %s311, 7
      %s314 = smul.addr %s313, 8
      %s315 = scalar_lea.vmem %s3, %s314
      // Predicated region
      $region33: #{tpu_custom_call.1} parent=31 // pred_check
        %p316 = pneg %p110
      $region34: #{tpu_custom_call.1} parent=31 // pred_check_branch
        %318 = sbr.rel (%p316) target = $region36
      $region35: #{tpu_custom_call.1} parent=31 // pred_region
        %s319 = smul.u32 2, %s14
      $region36: #{tpu_custom_call.1} parent=31 // pred_fallthru
        _
    $region32: #{tpu_custom_call.1} parent=5 // pred_fallthru
      _
    %p320 = scmp.le.s32.totalorder 2, %s9
    // Predicated region
    $region37: #{tpu_custom_call.1} parent=5 // pred_check
      %p321 = pneg %p320
    $region38: #{tpu_custom_call.1} parent=5 // pred_check_branch
      %323 = sbr.rel (%p321) target = $region40
    $region39: #{tpu_custom_call.1} parent=5 // pred_region
      %s324 = ssub.s32 %s9, 2
      // Predicated region
      $region41: #{tpu_custom_call.1} parent=39 // pred_check
        %p325 = pneg %p116
      $region42: #{tpu_custom_call.1} parent=39 // pred_check_branch
        %327 = sbr.rel (%p325) target = $region44
      $region43: #{tpu_custom_call.1} parent=39 // pred_region
        %s328 = smul.u32 2, %s15
        %p329 = scmp.lt.s32.totalorder %s328, 7
        %s330 = scalar_select %p329, %s328, 7
        %s331 = smul.addr %s330, 8
        %s332 = scalar_lea.vmem %s3, %s331
      $region44: #{tpu_custom_call.1} parent=39 // pred_fallthru
        _
    $region40: #{tpu_custom_call.1} parent=5 // pred_fallthru
      _
  $region6: #{tpu_custom_call.1} parent=0 // loop_footer
    %s13 = sadd.s32 1, %s9
  $region7: #{tpu_custom_call.1} parent=0 // loop_footer_branch
    %8 = sbr.rel target = $region3
  $region8: #{tpu_custom_call.1} parent=0 // loop_exit
    _

</llo_original>
